<compile_context>
chip_gen: v6e
topology: v6e:2x2x1
jax: 0.10.0
libtpu: 0.0.40
codegen_flags: <defaults>
</compile_context>

<pallas_src>
import jax
import jax.numpy as jnp
from jax.experimental import pallas as pl
from jax.experimental.pallas import tpu as pltpu

K_IN = 300   # input feature dim (matches torch.randn(300, 4) weight)
N_OUT = 4    # output feature dim

BLOCK_M = 1024  # batch tile; multiple of 8, VMEM-safe on v5e/v6e/v7x


def _matmul_kernel(x_ref, w_ref, o_ref):
    # One batch tile: (BM, K) @ (K, N) on the MXU with f32 accumulation.
    o_ref[...] = jnp.dot(
        x_ref[...], w_ref[...], preferred_element_type=jnp.float32
    ).astype(o_ref.dtype)


def single_nn_forward(x, weights, *, block_m=BLOCK_M):
    """Pallas equivalent of Single_nn.forward: y = x @ weights."""
    B, K = x.shape
    Kw, N = weights.shape
    assert K == Kw, f"inner dims mismatch: {K} vs {Kw}"

    # If the whole batch fits in one tile, use the full-dim block (satisfies
    # tiling rules via the "equal to full array dim" exception even for tiny
    # or non-multiple-of-8 B). Otherwise tile with block_m (a multiple of 8);
    # a ragged last tile is handled by Pallas with masked output writes.
    bm = B if B <= block_m else block_m
    grid_m = pl.cdiv(B, bm)

    itemsize = jnp.dtype(x.dtype).itemsize
    cost = pl.CostEstimate(
        flops=2 * B * K * N,
        transcendentals=0,
        bytes_accessed=(B * K + K * N + B * N) * itemsize,
    )

    return pl.pallas_call(
        _matmul_kernel,
        out_shape=jax.ShapeDtypeStruct((B, N), x.dtype),
        grid=(grid_m,),
        in_specs=[
            # Streamed, double-buffered x tiles over the batch axis.
            pl.BlockSpec((bm, K), lambda i: (i, 0)),
            # Weights: same block every step -> stays resident in VMEM.
            pl.BlockSpec((K, N), lambda i: (0, 0)),
        ],
        out_specs=pl.BlockSpec((bm, N), lambda i: (i, 0)),
        compiler_params=pltpu.CompilerParams(
            # Batch tiles are independent -> parallel (v7x 2-TC sharding).
            dimension_semantics=("parallel",),
        ),
        cost_estimate=cost,
    )(x, weights)


if __name__ == "__main__":
    key = jax.random.PRNGKey(0)
    k_w, k_x, k_x2 = jax.random.split(key, 3)

    # Deterministic parameter init (stand-in for torch.randn(300, 4)).
    weights = jax.random.normal(k_w, (K_IN, N_OUT), dtype=jnp.float32)

    # Small batch consistent with the module's forward (feature dim 300).
    B = 8
    x = jax.random.normal(k_x, (B, K_IN), dtype=jnp.float32)

    y = single_nn_forward(x, weights)
    y = jax.block_until_ready(y)

    y_ref = x @ weights
    assert y.shape == (B, N_OUT)
    assert jnp.allclose(y, y_ref, atol=1e-4, rtol=1e-4)

    # Second check: exercise the multi-step, pipelined grid with a ragged
    # last tile (2096 = 2*1024 + 48), still a small problem (~2.4 MiB of x).
    B2 = 2096
    x2 = jax.random.normal(k_x2, (B2, K_IN), dtype=jnp.float32)
    y2 = jax.block_until_ready(single_nn_forward(x2, weights))
    assert y2.shape == (B2, N_OUT)
    assert jnp.allclose(y2, x2 @ weights, atol=1e-4, rtol=1e-4)

    print("KERNEL_OK")
</pallas_src>

<mosaic_0001>
module attributes {stable_mosaic.version = 11 : i64} {
  func.func @_matmul_kernel(%arg0: i32, %arg1: memref<8x300xf32, #tpu.memory_space<vmem>>, %arg2: memref<300x4xf32, #tpu.memory_space<vmem>>, %arg3: memref<8x4xf32, #tpu.memory_space<vmem>>) attributes {dimension_semantics = [#tpu.dimension_semantics<parallel>], iteration_bounds = array<i64: 1>, scalar_prefetch = 0 : i64, scratch_operands = 0 : i64, tpu.core_type = #tpu.core_type<tc>, window_params = [{transform_indices = @transform_0, window_bounds = array<i64: 8, 300>}, {pipeline_mode = #tpu.pipeline_mode<synchronous>, transform_indices = @transform_1, window_bounds = array<i64: 300, 4>}, {transform_indices = @transform_2, window_bounds = array<i64: 8, 4>}]} {
    %c0 = arith.constant 0 : index
    %c0_0 = arith.constant 0 : index
    %0 = vector.load %arg1[%c0, %c0_0] : memref<8x300xf32, #tpu.memory_space<vmem>>, vector<8x300xf32>
    %c0_1 = arith.constant 0 : index
    %c0_2 = arith.constant 0 : index
    %1 = vector.load %arg2[%c0_1, %c0_2] : memref<300x4xf32, #tpu.memory_space<vmem>>, vector<300x4xf32>
    %cst = arith.constant dense<0.000000e+00> : vector<8x4xf32>
    %2 = tpu.matmul %0, %1, %cst {dimension_numbers = #tpu.dot_dimension_numbers<[1], [0], [0], [1], [0, 0, 1, 1], [], []>} : vector<8x300xf32>, vector<300x4xf32>, vector<8x4xf32> -> vector<8x4xf32>
    %c0_3 = arith.constant 0 : index
    %c0_4 = arith.constant 0 : index
    %3 = vector.load %arg3[%c0_3, %c0_4] : memref<8x4xf32, #tpu.memory_space<vmem>>, vector<8x4xf32>
    tpu.vector_store %arg3[%c0_3, %c0_4], %2 {strides = array<i32>} : memref<8x4xf32, #tpu.memory_space<vmem>>, vector<8x4xf32>,
    return
  }
  func.func @transform_0(%arg0: i32) -> (i32, i32) {
    %c0_i32 = arith.constant 0 : i32
    %c0_i32_0 = arith.constant 0 : i32
    return %arg0, %c0_i32 : i32, i32
  }
  func.func @transform_1(%arg0: i32) -> (i32, i32) {
    %c0_i32 = arith.constant 0 : i32
    %c0_i32_0 = arith.constant 0 : i32
    %c0_i32_1 = arith.constant 0 : i32
    return %c0_i32, %c0_i32_0 : i32, i32
  }
  func.func @transform_2(%arg0: i32) -> (i32, i32) {
    %c0_i32 = arith.constant 0 : i32
    %c0_i32_0 = arith.constant 0 : i32
    return %arg0, %c0_i32 : i32, i32
  }
}

</mosaic_0001>

<llo_original>
// kernel: tpu_custom_call.1
$region0: #{tpu_custom_call.1}
  #allocation0 [shape = 'u32[]', space=smem, size = 0x4, offset = 0x4, fixed_abs, tag = 'smem constant byte address 0x4 - core index']
  #allocation1 [shape = 'u32[144,128]{1,0:T(1,128)}', space=vmem, size = 0x12000, scoped, tag = 'internal scratch']
  %s0 = inlined_call_operand.vmem [shape: f32[8,300], index: 0, kind: input, shape index: {}]
  %s1 = inlined_call_operand.vmem [shape: f32[300,4], index: 1, kind: input, shape index: {}]
  %s2 = inlined_call_operand.vmem [shape: f32[8,4], index: 2, kind: output, shape index: {}]
  %s3 = sld [smem:[#allocation0]]
  $region18: #{tpu_custom_call.1} parent=0
    _
  %s5 = ssub.s32 1, %s3
  %s6 = scalar_select 0, %s5, %s3
  // Predicated region
  $region2: #{tpu_custom_call.1} parent=0 // pred_check
    _
  $region3: #{tpu_custom_call.1} parent=0 // pred_check_branch
    %8 = sbr.rel (0) target = $region5
  $region4: #{tpu_custom_call.1} parent=0 // pred_region
    _
  $region5: #{tpu_custom_call.1} parent=0 // pred_fallthru
    _
  // Predicated region
  $region6: #{tpu_custom_call.1} parent=0 // pred_check
    _
  $region7: #{tpu_custom_call.1} parent=0 // pred_check_branch
    %10 = sbr.rel (0) target = $region9
  $region8: #{tpu_custom_call.1} parent=0 // pred_region
    _
  $region9: #{tpu_custom_call.1} parent=0 // pred_fallthru
    _
  %v11 = vld [vmem:[%s0] sm:$0xff]
  %v12 = vld [vmem:[%s0 + $0x8] sm:$0xff]
  %v13 = vld [vmem:[%s0 + $0x10] sm:$0xff]
  %v14 = vld [vmem:[%s1] sm:$0xff]
  %v15 = vld [vmem:[%s1 + $0x8] sm:$0xff]
  %v16 = vld [vmem:[%s1 + $0x10] sm:$0xff]
  %v17 = vld [vmem:[%s1 + $0x18] sm:$0xff]
  %v18 = vld [vmem:[%s1 + $0x20] sm:$0xff]
  %v19 = vld [vmem:[%s1 + $0x28] sm:$0xff]
  %v20 = vld [vmem:[%s1 + $0x30] sm:$0xff]
  %v21 = vld [vmem:[%s1 + $0x38] sm:$0xff]
  %v22 = vld [vmem:[%s1 + $0x40] sm:$0xff]
  %v23 = vld [vmem:[%s1 + $0x48] sm:$0xff]
  %v24 = vld [vmem:[%s1 + $0x50] sm:$0xff]
  %v25 = vld [vmem:[%s1 + $0x58] sm:$0xff]
  %v26 = vld [vmem:[%s1 + $0x60] sm:$0xff]
  %v27 = vld [vmem:[%s1 + $0x68] sm:$0xff]
  %v28 = vld [vmem:[%s1 + $0x70] sm:$0xff]
  %v29 = vld [vmem:[%s1 + $0x78] sm:$0xff]
  %v30 = vld [vmem:[%s1 + $0x80] sm:$0xff]
  %v31 = vld [vmem:[%s1 + $0x88] sm:$0xff]
  %v32 = vld [vmem:[%s1 + $0x90] sm:$0xff]
  %v33 = vld [vmem:[%s1 + $0x98] sm:$0xff]
  %v34 = vld [vmem:[%s1 + $0xa0] sm:$0xff]
  %v35 = vld [vmem:[%s1 + $0xa8] sm:$0xff]
  %v36 = vld [vmem:[%s1 + $0xb0] sm:$0xff]
  %v37 = vld [vmem:[%s1 + $0xb8] sm:$0xff]
  %v38 = vld [vmem:[%s1 + $0xc0] sm:$0xff]
  %v39 = vld [vmem:[%s1 + $0xc8] sm:$0xff]
  %v40 = vld [vmem:[%s1 + $0xd0] sm:$0xff]
  %v41 = vld [vmem:[%s1 + $0xd8] sm:$0xff]
  %v42 = vld [vmem:[%s1 + $0xe0] sm:$0xff]
  %v43 = vld [vmem:[%s1 + $0xe8] sm:$0xff]
  %v44 = vld [vmem:[%s1 + $0xf0] sm:$0xff]
  %v45 = vld [vmem:[%s1 + $0xf8] sm:$0xff]
  %v46 = vld [vmem:[%s1 + $0x100] sm:$0xff]
  %v47 = vld [vmem:[%s1 + $0x108] sm:$0xff]
  %v48 = vld [vmem:[%s1 + $0x110] sm:$0xff]
  %v49 = vld [vmem:[%s1 + $0x118] sm:$0xff]
  %v50 = vld [vmem:[%s1 + $0x120] sm:$0xff]
  %v51 = vld [vmem:[%s1 + $0x128] sm:$0xf]
  %vm52 = vcmask 359424
  %v54 = vsel %vm52, %v13, 0
  %vm56 = vcmask 1043456
  %v58 = vsel %vm56, %v51, 0
  %60 = vmatprep.subr.mxu0 0.0
  %61 = vmatpush1.msra.mxu0 %v29
  %62 = vmatprep.subr.mxu0 0.0
  %63 = vmatpush1.msra.mxu0 %v28
  %64 = vmatprep.subr.mxu0 0.0
  %65 = vmatpush1.msra.mxu0 %v27
  %66 = vmatprep.subr.mxu0 0.0
  %67 = vmatpush1.msra.mxu0 %v26
  %68 = vmatprep.subr.mxu0 0.0
  %69 = vmatpush1.msra.mxu0 %v25
  %70 = vmatprep.subr.mxu0 0.0
  %71 = vmatpush1.msra.mxu0 %v24
  %72 = vmatprep.subr.mxu0 0.0
  %73 = vmatpush1.msra.mxu0 %v23
  %74 = vmatprep.subr.mxu0 0.0
  %75 = vmatpush1.msra.mxu0 %v22
  %76 = vmatprep.subr.mxu0 0.0
  %77 = vmatpush1.msra.mxu0 %v21
  %78 = vmatprep.subr.mxu0 0.0
  %79 = vmatpush1.msra.mxu0 %v20
  %80 = vmatprep.subr.mxu0 0.0
  %81 = vmatpush1.msra.mxu0 %v19
  %82 = vmatprep.subr.mxu0 0.0
  %83 = vmatpush1.msra.mxu0 %v18
  %84 = vmatprep.subr.mxu0 0.0
  %85 = vmatpush1.msra.mxu0 %v17
  %86 = vmatprep.subr.mxu0 0.0
  %87 = vmatpush1.msra.mxu0 %v16
  %88 = vmatprep.subr.mxu0 0.0
  %89 = vmatpush1.msra.mxu0 %v15
  %90 = vmatprep.subr.mxu0 0.0
  %91 = vmatpush1.msra.mxu0 %v14
  %92 = vmatprep.subr.mxu0 0.0
  %93 = vmatpush2.msra.mxu0 %v45
  %94 = vmatprep.subr.mxu0 0.0
  %95 = vmatpush2.msra.mxu0 %v44
  %96 = vmatprep.subr.mxu0 0.0
  %97 = vmatpush2.msra.mxu0 %v43
  %98 = vmatprep.subr.mxu0 0.0
  %99 = vmatpush2.msra.mxu0 %v42
  %100 = vmatprep.subr.mxu0 0.0
  %101 = vmatpush2.msra.mxu0 %v41
  %102 = vmatprep.subr.mxu0 0.0
  %103 = vmatpush2.msra.mxu0 %v40
  %104 = vmatprep.subr.mxu0 0.0
  %105 = vmatpush2.msra.mxu0 %v39
  %106 = vmatprep.subr.mxu0 0.0
  %107 = vmatpush2.msra.mxu0 %v38
  %108 = vmatprep.subr.mxu0 0.0
  %109 = vmatpush2.msra.mxu0 %v37
  %110 = vmatprep.subr.mxu0 0.0
  %111 = vmatpush2.msra.mxu0 %v36
  %112 = vmatprep.subr.mxu0 0.0
  %113 = vmatpush2.msra.mxu0 %v35
  %114 = vmatprep.subr.mxu0 0.0
  %115 = vmatpush2.msra.mxu0 %v34
  %116 = vmatprep.subr.mxu0 0.0
  %117 = vmatpush2.msra.mxu0 %v33
  %118 = vmatprep.subr.mxu0 0.0
  %119 = vmatpush2.msra.mxu0 %v32
  %120 = vmatprep.subr.mxu0 0.0
  %121 = vmatpush2.msra.mxu0 %v31
  %122 = vmatprep.subr.mxu0 0.0
  %123 = vmatpush2.msra.mxu0 %v30
  %124 = vmatprep.mubr.f32.mxu0 %v12
  %125 = vmatmul.mubr.f32.gmra.mxu0 %v11
  %v126 = vpop.f32.mrf.mxu0
  %v127 = vadd.f32 0.0, %v126
  %v128 = vpop.f32.mrf.mxu0
  %129 = vdwg.mxu0
  %130 = vmatprep.subr.mxu0 0.0
  %131 = vmatpush1.msra.mxu0 0.0
  %132 = vmatprep.subr.mxu0 0.0
  %133 = vmatpush1.msra.mxu0 0.0
  %134 = vmatprep.subr.mxu0 0.0
  %135 = vmatpush1.msra.mxu0 0.0
  %136 = vmatprep.subr.mxu0 0.0
  %137 = vmatpush1.msra.mxu0 0.0
  %138 = vmatprep.subr.mxu0 0.0
  %139 = vmatpush1.msra.mxu0 0.0
  %140 = vmatprep.subr.mxu0 0.0
  %141 = vmatpush1.msra.mxu0 0.0
  %142 = vmatprep.subr.mxu0 0.0
  %143 = vmatpush1.msra.mxu0 0.0
  %144 = vmatprep.subr.mxu0 0.0
  %145 = vmatpush1.msra.mxu0 0.0
  %146 = vmatprep.subr.mxu0 0.0
  %147 = vmatpush1.msra.mxu0 0.0
  %148 = vmatprep.subr.mxu0 0.0
  %149 = vmatpush1.msra.mxu0 0.0
  %150 = vmatprep.subr.mxu0 0.0
  %151 = vmatpush1.msra.mxu0 %v58
  %152 = vmatprep.subr.mxu0 0.0
  %153 = vmatpush1.msra.mxu0 %v50
  %154 = vmatprep.subr.mxu0 0.0
  %155 = vmatpush1.msra.mxu0 %v49
  %156 = vmatprep.subr.mxu0 0.0
  %157 = vmatpush1.msra.mxu0 %v48
  %158 = vmatprep.subr.mxu0 0.0
  %159 = vmatpush1.msra.mxu0 %v47
  %160 = vmatprep.subr.mxu0 0.0
  %161 = vmatpush1.msra.mxu0 %v46
  %162 = vmatprep.subr.mxu0 0.0
  %163 = vmatpush2.msra.mxu0 0.0
  %164 = vmatprep.subr.mxu0 0.0
  %165 = vmatpush2.msra.mxu0 0.0
  %166 = vmatprep.subr.mxu0 0.0
  %167 = vmatpush2.msra.mxu0 0.0
  %168 = vmatprep.subr.mxu0 0.0
  %169 = vmatpush2.msra.mxu0 0.0
  %170 = vmatprep.subr.mxu0 0.0
  %171 = vmatpush2.msra.mxu0 0.0
  %172 = vmatprep.subr.mxu0 0.0
  %173 = vmatpush2.msra.mxu0 0.0
  %174 = vmatprep.subr.mxu0 0.0
  %175 = vmatpush2.msra.mxu0 0.0
  %176 = vmatprep.subr.mxu0 0.0
  %177 = vmatpush2.msra.mxu0 0.0
  %178 = vmatprep.subr.mxu0 0.0
  %179 = vmatpush2.msra.mxu0 0.0
  %180 = vmatprep.subr.mxu0 0.0
  %181 = vmatpush2.msra.mxu0 0.0
  %182 = vmatprep.subr.mxu0 0.0
  %183 = vmatpush2.msra.mxu0 0.0
  %184 = vmatprep.subr.mxu0 0.0
  %185 = vmatpush2.msra.mxu0 0.0
  %186 = vmatprep.subr.mxu0 0.0
  %187 = vmatpush2.msra.mxu0 0.0
  %188 = vmatprep.subr.mxu0 0.0
  %189 = vmatpush2.msra.mxu0 0.0
  %190 = vmatprep.subr.mxu0 0.0
  %191 = vmatpush2.msra.mxu0 0.0
  %192 = vmatprep.subr.mxu0 0.0
  %193 = vmatpush2.msra.mxu0 0.0
  %194 = vmatprep.mubr.f32.mxu0 0.0
  %195 = vmatmul.mubr.f32.gmra.mxu0 %v54
  %v196 = vpop.f32.mrf.mxu0
  %v197 = vadd.f32 %v127, %v196
  %v198 = vpop.f32.mrf.mxu0
  %199 = vdwg.mxu0
  %vm200 = vcmask 31744
  %201 = vst.msk [vmem:[%s2] sm:$0xff] %vm200, %v197
  // Predicated region
  $region10: #{tpu_custom_call.1} parent=0 // pred_check
    _
  $region11: #{tpu_custom_call.1} parent=0 // pred_check_branch
    %203 = sbr.rel (0) target = $region13
  $region12: #{tpu_custom_call.1} parent=0 // pred_region
    _
  $region13: #{tpu_custom_call.1} parent=0 // pred_fallthru
    _
  // Predicated region
  $region14: #{tpu_custom_call.1} parent=0 // pred_check
    _
  $region15: #{tpu_custom_call.1} parent=0 // pred_check_branch
    %205 = sbr.rel (0) target = $region17
  $region16: #{tpu_custom_call.1} parent=0 // pred_region
    _
  $region17: #{tpu_custom_call.1} parent=0 // pred_fallthru
    _

</llo_original>
